<compile_context>
chip_gen: v5e
topology: v5e:2x2
jax: 0.10.0
libtpu: 0.0.40
codegen_flags: <defaults>
</compile_context>

<pallas_src>
import functools

import jax
import jax.numpy as jnp
from jax.experimental import pallas as pl
from jax.experimental.pallas import tpu as pltpu

EPS = 1e-5  # PyTorch BatchNorm1d default


# -----------------------------------------------------------------------------
# Kernel
# -----------------------------------------------------------------------------
def projection_head_kernel(x_ref, w1_ref, gamma_ref, beta_ref, w2_ref, b2_ref,
                           o_ref):
    k = pl.program_id(0)

    @pl.when(k == 0)
    def _init():
        # Output block index is constant across k -> o_ref is the resident
        # f32 accumulator (no separate scratch buffer needed).
        o_ref[...] = jnp.zeros_like(o_ref)

    # ---- Linear 1 (no bias), bf16 x bf16 -> f32 accumulate on the MXU ----
    #   (B, D_in) @ (D_in, tk) -> (B, tk)
    h = jnp.dot(x_ref[...], w1_ref[...], preferred_element_type=jnp.float32)

    # ---- BatchNorm1d (training mode, exact full-batch stats) as an FMA ----
    # var = E[h^2] - E[h]^2 avoids materializing a centered (B, tk) temporary;
    # the normalization collapses to a single scale/shift per feature.
    mean = jnp.mean(h, axis=0, keepdims=True)                 # (1, tk)
    m2 = jnp.mean(h * h, axis=0, keepdims=True)               # (1, tk)
    var = jnp.maximum(m2 - mean * mean, 0.0)
    scale = gamma_ref[...] * jax.lax.rsqrt(var + EPS)         # (1, tk)
    shift = beta_ref[...] - mean * scale                      # (1, tk)

    # ---- BN affine + ReLU fused on the VPU ----
    h_act = jnp.maximum(h * scale + shift, 0.0)

    # ---- Linear 2 partial: accumulate over H tiles into the resident output ----
    #   (B, tk) @ (tk, D_out_p) -> (B, D_out_p), bf16 operands, f32 accumulate
    o_ref[...] += jnp.dot(h_act.astype(jnp.bfloat16), w2_ref[...],
                          preferred_element_type=jnp.float32)

    # ---- Finalize: add the bias exactly once ----
    @pl.when(k == pl.num_programs(0) - 1)
    def _finalize():
        o_ref[...] += b2_ref[...]


# -----------------------------------------------------------------------------
# One-time parameter preparation (hoisted out of the per-call hot path)
# -----------------------------------------------------------------------------
def prepare_params(w1_t, gamma, beta, w2_t, b2, *, tk=512):
    """Casts weights to bf16 and zero-pads once, so the per-call forward does
    not re-stream the largest tensors through HBM on every invocation.

    w1_t:  (D_in, H)   Linear1 weight, pre-transposed (no bias)
    gamma: (H,) or (1, H), beta: (H,) or (1, H)   BatchNorm1d affine parameters
    w2_t:  (H, D_out)  Linear2 weight, pre-transposed
    b2:    (D_out,) or (1, D_out)  Linear2 bias
    Returns (w1_bf, gamma_f32, beta_f32, w2_bf, b2_f32, tk_eff, d_out).
    """
    D_in, H = w1_t.shape
    H2, D_out = w2_t.shape
    assert H == H2, "w1_t / w2_t hidden dims mismatch"

    # Keep tk a multiple of 128 (MXU-aligned) and never pad H past the next
    # multiple of 128.
    tk = int(min(int(tk), 128 * pl.cdiv(H, 128)))
    tk = max(128, (tk // 128) * 128)

    H_p = tk * pl.cdiv(H, tk)
    D_out_p = 128 * pl.cdiv(D_out, 128)

    w1_bf = w1_t.astype(jnp.bfloat16)
    w2_bf = w2_t.astype(jnp.bfloat16)
    gamma = jnp.asarray(gamma, jnp.float32).reshape(1, H)
    beta = jnp.asarray(beta, jnp.float32).reshape(1, H)
    b2 = jnp.asarray(b2, jnp.float32).reshape(1, D_out)

    # Zero-pads are mathematically inert for this head (gamma padded with 1 so
    # the padded features stay finite; their w2 rows are zero).
    if H_p != H:
        w1_bf = jnp.pad(w1_bf, ((0, 0), (0, H_p - H)))
        gamma = jnp.pad(gamma, ((0, 0), (0, H_p - H)), constant_values=1.0)
        beta = jnp.pad(beta, ((0, 0), (0, H_p - H)))
        w2_bf = jnp.pad(w2_bf, ((0, H_p - H), (0, 0)))
    if D_out_p != D_out:
        w2_bf = jnp.pad(w2_bf, ((0, 0), (0, D_out_p - D_out)))
        b2 = jnp.pad(b2, ((0, 0), (0, D_out_p - D_out)))

    return w1_bf, gamma, beta, w2_bf, b2, tk, D_out


def _vmem_limit_bytes():
    # Generation-aware VMEM budget: ~3/4 of physical VMEM (≈96 MiB on
    # v5e/v6e's 128 MiB, ≈48 MiB on v7x's 64 MiB).
    try:
        cap = pltpu.get_tpu_info().vmem_capacity_bytes
    except Exception:
        cap = 64 * 1024 * 1024
    return int(cap) * 3 // 4


# -----------------------------------------------------------------------------
# Forward wrapper
# -----------------------------------------------------------------------------
@functools.partial(jax.jit,
                   static_argnames=("tk", "d_out", "single_buffer_resident"))
def _forward_impl(x, w1, gamma, beta, w2, b2, *, tk, d_out,
                  single_buffer_resident):
    B, D_in = x.shape
    H_p = w1.shape[1]
    D_out_p = w2.shape[1]
    nk = H_p // tk

    # x changes every call, so its bf16 cast stays here (cheap, batch-sized).
    # Note: very small B / D_in (like the test shapes) underfill the MXU; for
    # the real BYOL config (B>=256, D_in=2048, H=4096, D_out=256) it is full.
    x_bf = x.astype(jnp.bfloat16)

    def resident_spec(block_shape, index_map):
        # Constant-index blocks are never re-fetched across the reduction
        # axis; a single buffer halves their VMEM footprint (matters most on
        # v7x's 64 MiB VMEM).
        if single_buffer_resident:
            return pl.BlockSpec(block_shape, index_map,
                                pipeline_mode=pl.Buffered(1))
        return pl.BlockSpec(block_shape, index_map)

    out = pl.pallas_call(
        projection_head_kernel,
        out_shape=jax.ShapeDtypeStruct((B, D_out_p), jnp.float32),
        grid=(nk,),
        in_specs=[
            resident_spec((B, D_in), lambda k: (0, 0)),      # x: resident
            pl.BlockSpec((D_in, tk), lambda k: (0, k)),      # w1 tile (bf16)
            pl.BlockSpec((1, tk), lambda k: (0, k)),         # gamma tile (f32)
            pl.BlockSpec((1, tk), lambda k: (0, k)),         # beta tile (f32)
            pl.BlockSpec((tk, D_out_p), lambda k: (k, 0)),   # w2 tile (bf16)
            resident_spec((1, D_out_p), lambda k: (0, 0)),   # bias: resident
        ],
        out_specs=resident_spec((B, D_out_p), lambda k: (0, 0)),
        compiler_params=pltpu.CompilerParams(
            # Single reduction axis over H tiles -> accumulator pattern.
            dimension_semantics=("arbitrary",),
            vmem_limit_bytes=_vmem_limit_bytes(),
        ),
    )(x_bf, w1, gamma, beta, w2, b2)

    out = out[:, :d_out]
    return out if x.dtype == jnp.float32 else out.astype(x.dtype)


def projection_head_forward(x, w1, gamma, beta, w2, b2, *, tk, d_out):
    """Forward pass of the BYOL projection head on pre-prepared params."""
    if hasattr(pl, "Buffered"):
        try:
            return jax.block_until_ready(
                _forward_impl(x, w1, gamma, beta, w2, b2, tk=tk, d_out=d_out,
                              single_buffer_resident=True))
        except Exception:
            # Fallback for jax versions where pipeline_mode=Buffered(1) is not
            # supported on top-level pallas_call block specs.
            pass
    return _forward_impl(x, w1, gamma, beta, w2, b2, tk=tk, d_out=d_out,
                         single_buffer_resident=False)


# -----------------------------------------------------------------------------
# Test harness
# -----------------------------------------------------------------------------
def init_params(key, input_dim, hidden_dim, output_dim):
    """Deterministic synthetic parameters (Kaiming-uniform-like range, as in nn.Linear)."""
    k1, k2, k3 = jax.random.split(key, 3)
    bound1 = 1.0 / jnp.sqrt(input_dim)
    bound2 = 1.0 / jnp.sqrt(hidden_dim)
    # Stored already transposed: (in, out)
    w1_t = jax.random.uniform(k1, (input_dim, hidden_dim), jnp.float32, -bound1, bound1)
    w2_t = jax.random.uniform(k2, (hidden_dim, output_dim), jnp.float32, -bound2, bound2)
    b2 = jax.random.uniform(k3, (1, output_dim), jnp.float32, -bound2, bound2)
    # BatchNorm1d affine params at PyTorch init values
    gamma = jnp.ones((1, hidden_dim), jnp.float32)
    beta = jnp.zeros((1, hidden_dim), jnp.float32)
    return w1_t, gamma, beta, w2_t, b2


def reference_forward(x, w1_t, gamma, beta, w2_t, b2):
    """Pure-JAX reference mirroring the kernel's bf16 matmul operands."""
    xb = x.astype(jnp.bfloat16).astype(jnp.float32)
    w1b = w1_t.astype(jnp.bfloat16).astype(jnp.float32)
    w2b = w2_t.astype(jnp.bfloat16).astype(jnp.float32)
    h = xb @ w1b
    mean = jnp.mean(h, axis=0, keepdims=True)
    var = jnp.mean((h - mean) ** 2, axis=0, keepdims=True)
    h = (h - mean) * jax.lax.rsqrt(var + EPS) * gamma + beta
    h = jnp.maximum(h, 0.0)
    h = h.astype(jnp.bfloat16).astype(jnp.float32)  # kernel feeds bf16 acts to Linear2
    return h @ w2b + b2


if __name__ == "__main__":
    key = jax.random.PRNGKey(0)
    kx, kp = jax.random.split(key)

    # Small shapes; deliberately non-multiples of 128 to exercise the one-time
    # padding (H: 192 -> 256, D_out: 96 -> 128).
    B, D_IN, HID, D_OUT = 16, 48, 192, 96
    x = jax.random.normal(kx, (B, D_IN), jnp.float32)
    w1_t, gamma, beta, w2_t, b2 = init_params(kp, D_IN, HID, D_OUT)

    # One-time parameter prep (bf16 cast + lane-dense padding), hoisted out of
    # the per-call hot path.
    w1p, gp, bp, w2p, b2p, tk, d_out = prepare_params(
        w1_t, gamma, beta, w2_t, b2, tk=512)

    out = projection_head_forward(x, w1p, gp, bp, w2p, b2p, tk=tk, d_out=d_out)
    out = jax.block_until_ready(out)

    ref = reference_forward(x, w1_t, gamma, beta, w2_t, b2)
    assert out.shape == (B, D_OUT)
    assert jnp.allclose(out, ref, atol=1e-2, rtol=1e-2), "mismatch vs pure-JAX reference"

    print("KERNEL_OK")
</pallas_src>

<mosaic_0001>
module attributes {stable_mosaic.version = 11 : i64} {
  func.func @projection_head_kernel(%arg0: i32, %arg1: memref<16x48xbf16, #tpu.memory_space<vmem>>, %arg2: memref<48x256xbf16, #tpu.memory_space<vmem>>, %arg3: memref<1x256xf32, #tpu.memory_space<vmem>>, %arg4: memref<1x256xf32, #tpu.memory_space<vmem>>, %arg5: memref<256x128xbf16, #tpu.memory_space<vmem>>, %arg6: memref<1x128xf32, #tpu.memory_space<vmem>>, %arg7: memref<16x128xf32, #tpu.memory_space<vmem>>) attributes {dimension_semantics = [#tpu.dimension_semantics<arbitrary>], iteration_bounds = array<i64: 1>, scalar_prefetch = 0 : i64, scratch_operands = 0 : i64, tpu.core_type = #tpu.core_type<tc>, window_params = [{pipeline_mode = #tpu.pipeline_mode<synchronous>, transform_indices = @transform_0, window_bounds = array<i64: 16, 48>}, {transform_indices = @transform_1, window_bounds = array<i64: 48, 256>}, {transform_indices = @transform_2, window_bounds = array<i64: 1, 256>}, {transform_indices = @transform_3, window_bounds = array<i64: 1, 256>}, {transform_indices = @transform_4, window_bounds = array<i64: 256, 128>}, {pipeline_mode = #tpu.pipeline_mode<synchronous>, transform_indices = @transform_5, window_bounds = array<i64: 1, 128>}, {pipeline_mode = #tpu.pipeline_mode<synchronous>, transform_indices = @transform_6, window_bounds = array<i64: 16, 128>}]} {
    %c0_i32 = arith.constant 0 : i32
    %0 = arith.cmpi eq, %arg0, %c0_i32 : i32
    %1 = arith.extui %0 : i1 to i32
    %c0_i32_0 = arith.constant 0 : i32
    %2 = arith.cmpi ne, %1, %c0_i32_0 : i32
    scf.if %2 {
      %cst_24 = arith.constant 0.000000e+00 : f32
      %42 = vector.broadcast %cst_24 : f32 to vector<16x128xf32>
      %c0_25 = arith.constant 0 : index
      %c0_26 = arith.constant 0 : index
      %43 = vector.load %arg7[%c0_25, %c0_26] : memref<16x128xf32, #tpu.memory_space<vmem>>, vector<16x128xf32>
      tpu.vector_store %arg7[%c0_25, %c0_26], %42 {strides = array<i32>} : memref<16x128xf32, #tpu.memory_space<vmem>>, vector<16x128xf32>,
    } else {
    }
    %c0 = arith.constant 0 : index
    %c0_1 = arith.constant 0 : index
    %3 = vector.load %arg1[%c0, %c0_1] : memref<16x48xbf16, #tpu.memory_space<vmem>>, vector<16x48xbf16>
    %c0_2 = arith.constant 0 : index
    %c0_3 = arith.constant 0 : index
    %4 = vector.load %arg2[%c0_2, %c0_3] : memref<48x256xbf16, #tpu.memory_space<vmem>>, vector<48x256xbf16>
    %cst = arith.constant dense<0.000000e+00> : vector<16x256xf32>
    %5 = tpu.matmul %3, %4, %cst {dimension_numbers = #tpu.dot_dimension_numbers<[1], [0], [0], [1], [0, 0, 1, 1], [], []>} : vector<16x48xbf16>, vector<48x256xbf16>, vector<16x256xf32> -> vector<16x256xf32>
    %cst_4 = arith.constant dense<0.000000e+00> : vector<256xf32>
    %6 = vector.multi_reduction <add>, %5, %cst_4 [0] : vector<16x256xf32> to vector<256xf32>
    %7 = vector.shape_cast %6 : vector<256xf32> to vector<1x256xf32>
    %cst_5 = arith.constant 1.600000e+01 : f32
    %8 = vector.broadcast %cst_5 : f32 to vector<1x256xf32>
    %9 = arith.divf %7, %8 : vector<1x256xf32>
    %10 = arith.mulf %5, %5 : vector<16x256xf32>
    %cst_6 = arith.constant dense<0.000000e+00> : vector<256xf32>
    %11 = vector.multi_reduction <add>, %10, %cst_6 [0] : vector<16x256xf32> to vector<256xf32>
    %12 = vector.shape_cast %11 : vector<256xf32> to vector<1x256xf32>
    %cst_7 = arith.constant 1.600000e+01 : f32
    %13 = vector.broadcast %cst_7 : f32 to vector<1x256xf32>
    %14 = arith.divf %12, %13 : vector<1x256xf32>
    %15 = arith.mulf %9, %9 : vector<1x256xf32>
    %16 = arith.subf %14, %15 : vector<1x256xf32>
    %cst_8 = arith.constant 0.000000e+00 : f32
    %17 = vector.broadcast %cst_8 : f32 to vector<1x256xf32>
    %18 = arith.maximumf %16, %17 : vector<1x256xf32>
    %c0_9 = arith.constant 0 : index
    %c0_10 = arith.constant 0 : index
    %19 = vector.load %arg3[%c0_9, %c0_10] : memref<1x256xf32, #tpu.memory_space<vmem>>, vector<1x256xf32>
    %cst_11 = arith.constant 9.99999974E-6 : f32
    %20 = vector.broadcast %cst_11 : f32 to vector<1x256xf32>
    %21 = arith.addf %18, %20 : vector<1x256xf32>
    %22 = math.rsqrt %21 : vector<1x256xf32>
    %23 = arith.mulf %19, %22 : vector<1x256xf32>
    %c0_12 = arith.constant 0 : index
    %c0_13 = arith.constant 0 : index
    %24 = vector.load %arg4[%c0_12, %c0_13] : memref<1x256xf32, #tpu.memory_space<vmem>>, vector<1x256xf32>
    %25 = arith.mulf %9, %23 : vector<1x256xf32>
    %26 = arith.subf %24, %25 : vector<1x256xf32>
    %27 = vector.broadcast %23 : vector<1x256xf32> to vector<16x256xf32>
    %28 = arith.mulf %5, %27 : vector<16x256xf32>
    %29 = vector.broadcast %26 : vector<1x256xf32> to vector<16x256xf32>
    %30 = arith.addf %28, %29 : vector<16x256xf32>
    %cst_14 = arith.constant 0.000000e+00 : f32
    %31 = vector.broadcast %cst_14 : f32 to vector<16x256xf32>
    %32 = arith.maximumf %30, %31 : vector<16x256xf32>
    %c0_15 = arith.constant 0 : index
    %c0_16 = arith.constant 0 : index
    %33 = vector.load %arg7[%c0_15, %c0_16] : memref<16x128xf32, #tpu.memory_space<vmem>>, vector<16x128xf32>
    %34 = arith.truncf %32 : vector<16x256xf32> to vector<16x256xbf16>
    %c0_17 = arith.constant 0 : index
    %c0_18 = arith.constant 0 : index
    %35 = vector.load %arg5[%c0_17, %c0_18] : memref<256x128xbf16, #tpu.memory_space<vmem>>, vector<256x128xbf16>
    %cst_19 = arith.constant dense<0.000000e+00> : vector<16x128xf32>
    %36 = tpu.matmul %34, %35, %cst_19 {dimension_numbers = #tpu.dot_dimension_numbers<[1], [0], [0], [1], [0, 0, 1, 1], [], []>} : vector<16x256xbf16>, vector<256x128xbf16>, vector<16x128xf32> -> vector<16x128xf32>
    %37 = arith.addf %33, %36 : vector<16x128xf32>
    %c0_20 = arith.constant 0 : index
    %c0_21 = arith.constant 0 : index
    %38 = vector.load %arg7[%c0_20, %c0_21] : memref<16x128xf32, #tpu.memory_space<vmem>>, vector<16x128xf32>
    tpu.vector_store %arg7[%c0_20, %c0_21], %37 {strides = array<i32>} : memref<16x128xf32, #tpu.memory_space<vmem>>, vector<16x128xf32>,
    %c0_i32_22 = arith.constant 0 : i32
    %39 = arith.cmpi eq, %arg0, %c0_i32_22 : i32
    %40 = arith.extui %39 : i1 to i32
    %c0_i32_23 = arith.constant 0 : i32
    %41 = arith.cmpi ne, %40, %c0_i32_23 : i32
    scf.if %41 {
      %c0_24 = arith.constant 0 : index
      %c0_25 = arith.constant 0 : index
      %42 = vector.load %arg7[%c0_24, %c0_25] : memref<16x128xf32, #tpu.memory_space<vmem>>, vector<16x128xf32>
      %c0_26 = arith.constant 0 : index
      %c0_27 = arith.constant 0 : index
      %43 = vector.load %arg6[%c0_26, %c0_27] : memref<1x128xf32, #tpu.memory_space<vmem>>, vector<1x128xf32>
      %44 = vector.broadcast %43 : vector<1x128xf32> to vector<16x128xf32>
      %45 = arith.addf %42, %44 : vector<16x128xf32>
      %c0_28 = arith.constant 0 : index
      %c0_29 = arith.constant 0 : index
      %46 = vector.load %arg7[%c0_28, %c0_29] : memref<16x128xf32, #tpu.memory_space<vmem>>, vector<16x128xf32>
      tpu.vector_store %arg7[%c0_28, %c0_29], %45 {strides = array<i32>} : memref<16x128xf32, #tpu.memory_space<vmem>>, vector<16x128xf32>,
    } else {
    }
    return
  }
  func.func @transform_0(%arg0: i32) -> (i32, i32) {
    %c0_i32 = arith.constant 0 : i32
    %c0_i32_0 = arith.constant 0 : i32
    %c0_i32_1 = arith.constant 0 : i32
    return %c0_i32, %c0_i32_0 : i32, i32
  }
  func.func @transform_1(%arg0: i32) -> (i32, i32) {
    %c0_i32 = arith.constant 0 : i32
    %c0_i32_0 = arith.constant 0 : i32
    return %c0_i32, %arg0 : i32, i32
  }
  func.func @transform_2(%arg0: i32) -> (i32, i32) {
    %c0_i32 = arith.constant 0 : i32
    %c0_i32_0 = arith.constant 0 : i32
    return %c0_i32, %arg0 : i32, i32
  }
  func.func @transform_3(%arg0: i32) -> (i32, i32) {
    %c0_i32 = arith.constant 0 : i32
    %c0_i32_0 = arith.constant 0 : i32
    return %c0_i32, %arg0 : i32, i32
  }
  func.func @transform_4(%arg0: i32) -> (i32, i32) {
    %c0_i32 = arith.constant 0 : i32
    %c0_i32_0 = arith.constant 0 : i32
    return %arg0, %c0_i32 : i32, i32
  }
  func.func @transform_5(%arg0: i32) -> (i32, i32) {
    %c0_i32 = arith.constant 0 : i32
    %c0_i32_0 = arith.constant 0 : i32
    %c0_i32_1 = arith.constant 0 : i32
    return %c0_i32, %c0_i32_0 : i32, i32
  }
  func.func @transform_6(%arg0: i32) -> (i32, i32) {
    %c0_i32 = arith.constant 0 : i32
    %c0_i32_0 = arith.constant 0 : i32
    %c0_i32_1 = arith.constant 0 : i32
    return %c0_i32, %c0_i32_0 : i32, i32
  }
}

module attributes {stable_mosaic.version = 11 : i64} {
  func.func @projection_head_kernel(%arg0: i32, %arg1: memref<16x48xbf16, #tpu.memory_space<vmem>>, %arg2: memref<48x256xbf16, #tpu.memory_space<vmem>>, %arg3: memref<1x256xf32, #tpu.memory_space<vmem>>, %arg4: memref<1x256xf32, #tpu.memory_space<vmem>>, %arg5: memref<256x128xbf16, #tpu.memory_space<vmem>>, %arg6: memref<1x128xf32, #tpu.memory_space<vmem>>, %arg7: memref<16x128xf32, #tpu.memory_space<vmem>>) attributes {dimension_semantics = [#tpu.dimension_semantics<arbitrary>], iteration_bounds = array<i64: 1>, scalar_prefetch = 0 : i64, scratch_operands = 0 : i64, tpu.core_type = #tpu.core_type<tc>, window_params = [{pipeline_mode = #tpu.pipeline_mode<synchronous>, transform_indices = @transform_0, window_bounds = array<i64: 16, 48>}, {transform_indices = @transform_1, window_bounds = array<i64: 48, 256>}, {transform_indices = @transform_2, window_bounds = array<i64: 1, 256>}, {transform_indices = @transform_3, window_bounds = array<i64: 1, 256>}, {transform_indices = @transform_4, window_bounds = array<i64: 256, 128>}, {pipeline_mode = #tpu.pipeline_mode<synchronous>, transform_indices = @transform_5, window_bounds = array<i64: 1, 128>}, {pipeline_mode = #tpu.pipeline_mode<synchronous>, transform_indices = @transform_6, window_bounds = array<i64: 16, 128>}]} {
    %c0_i32 = arith.constant 0 : i32
    %0 = arith.cmpi eq, %arg0, %c0_i32 : i32
    %1 = arith.extui %0 : i1 to i32
    %c0_i32_0 = arith.constant 0 : i32
    %2 = arith.cmpi ne, %1, %c0_i32_0 : i32
    scf.if %2 {
      %cst_24 = arith.constant 0.000000e+00 : f32
      %42 = vector.broadcast %cst_24 : f32 to vector<16x128xf32>
      %c0_25 = arith.constant 0 : index
      %c0_26 = arith.constant 0 : index
      %43 = vector.load %arg7[%c0_25, %c0_26] : memref<16x128xf32, #tpu.memory_space<vmem>>, vector<16x128xf32>
      tpu.vector_store %arg7[%c0_25, %c0_26], %42 {strides = array<i32>} : memref<16x128xf32, #tpu.memory_space<vmem>>, vector<16x128xf32>,
    } else {
    }
    %c0 = arith.constant 0 : index
    %c0_1 = arith.constant 0 : index
    %3 = vector.load %arg1[%c0, %c0_1] : memref<16x48xbf16, #tpu.memory_space<vmem>>, vector<16x48xbf16>
    %c0_2 = arith.constant 0 : index
    %c0_3 = arith.constant 0 : index
    %4 = vector.load %arg2[%c0_2, %c0_3] : memref<48x256xbf16, #tpu.memory_space<vmem>>, vector<48x256xbf16>
    %cst = arith.constant dense<0.000000e+00> : vector<16x256xf32>
    %5 = tpu.matmul %3, %4, %cst {dimension_numbers = #tpu.dot_dimension_numbers<[1], [0], [0], [1], [0, 0, 1, 1], [], []>} : vector<16x48xbf16>, vector<48x256xbf16>, vector<16x256xf32> -> vector<16x256xf32>
    %cst_4 = arith.constant dense<0.000000e+00> : vector<256xf32>
    %6 = vector.multi_reduction <add>, %5, %cst_4 [0] : vector<16x256xf32> to vector<256xf32>
    %7 = vector.shape_cast %6 : vector<256xf32> to vector<1x256xf32>
    %cst_5 = arith.constant 1.600000e+01 : f32
    %8 = vector.broadcast %cst_5 : f32 to vector<1x256xf32>
    %9 = arith.divf %7, %8 : vector<1x256xf32>
    %10 = arith.mulf %5, %5 : vector<16x256xf32>
    %cst_6 = arith.constant dense<0.000000e+00> : vector<256xf32>
    %11 = vector.multi_reduction <add>, %10, %cst_6 [0] : vector<16x256xf32> to vector<256xf32>
    %12 = vector.shape_cast %11 : vector<256xf32> to vector<1x256xf32>
    %cst_7 = arith.constant 1.600000e+01 : f32
    %13 = vector.broadcast %cst_7 : f32 to vector<1x256xf32>
    %14 = arith.divf %12, %13 : vector<1x256xf32>
    %15 = arith.mulf %9, %9 : vector<1x256xf32>
    %16 = arith.subf %14, %15 : vector<1x256xf32>
    %cst_8 = arith.constant 0.000000e+00 : f32
    %17 = vector.broadcast %cst_8 : f32 to vector<1x256xf32>
    %18 = arith.maximumf %16, %17 : vector<1x256xf32>
    %c0_9 = arith.constant 0 : index
    %c0_10 = arith.constant 0 : index
    %19 = vector.load %arg3[%c0_9, %c0_10] : memref<1x256xf32, #tpu.memory_space<vmem>>, vector<1x256xf32>
    %cst_11 = arith.constant 9.99999974E-6 : f32
    %20 = vector.broadcast %cst_11 : f32 to vector<1x256xf32>
    %21 = arith.addf %18, %20 : vector<1x256xf32>
    %22 = math.rsqrt %21 : vector<1x256xf32>
    %23 = arith.mulf %19, %22 : vector<1x256xf32>
    %c0_12 = arith.constant 0 : index
    %c0_13 = arith.constant 0 : index
    %24 = vector.load %arg4[%c0_12, %c0_13] : memref<1x256xf32, #tpu.memory_space<vmem>>, vector<1x256xf32>
    %25 = arith.mulf %9, %23 : vector<1x256xf32>
    %26 = arith.subf %24, %25 : vector<1x256xf32>
    %27 = vector.broadcast %23 : vector<1x256xf32> to vector<16x256xf32>
    %28 = arith.mulf %5, %27 : vector<16x256xf32>
    %29 = vector.broadcast %26 : vector<1x256xf32> to vector<16x256xf32>
    %30 = arith.addf %28, %29 : vector<16x256xf32>
    %cst_14 = arith.constant 0.000000e+00 : f32
    %31 = vector.broadcast %cst_14 : f32 to vector<16x256xf32>
    %32 = arith.maximumf %30, %31 : vector<16x256xf32>
    %c0_15 = arith.constant 0 : index
    %c0_16 = arith.constant 0 : index
    %33 = vector.load %arg7[%c0_15, %c0_16] : memref<16x128xf32, #tpu.memory_space<vmem>>, vector<16x128xf32>
    %34 = arith.truncf %32 : vector<16x256xf32> to vector<16x256xbf16>
    %c0_17 = arith.constant 0 : index
    %c0_18 = arith.constant 0 : index
    %35 = vector.load %arg5[%c0_17, %c0_18] : memref<256x128xbf16, #tpu.memory_space<vmem>>, vector<256x128xbf16>
    %cst_19 = arith.constant dense<0.000000e+00> : vector<16x128xf32>
    %36 = tpu.matmul %34, %35, %cst_19 {dimension_numbers = #tpu.dot_dimension_numbers<[1], [0], [0], [1], [0, 0, 1, 1], [], []>} : vector<16x256xbf16>, vector<256x128xbf16>, vector<16x128xf32> -> vector<16x128xf32>
    %37 = arith.addf %33, %36 : vector<16x128xf32>
    %c0_20 = arith.constant 0 : index
    %c0_21 = arith.constant 0 : index
    %38 = vector.load %arg7[%c0_20, %c0_21] : memref<16x128xf32, #tpu.memory_space<vmem>>, vector<16x128xf32>
    tpu.vector_store %arg7[%c0_20, %c0_21], %37 {strides = array<i32>} : memref<16x128xf32, #tpu.memory_space<vmem>>, vector<16x128xf32>,
    %c0_i32_22 = arith.constant 0 : i32
    %39 = arith.cmpi eq, %arg0, %c0_i32_22 : i32
    %40 = arith.extui %39 : i1 to i32
    %c0_i32_23 = arith.constant 0 : i32
    %41 = arith.cmpi ne, %40, %c0_i32_23 : i32
    scf.if %41 {
      %c0_24 = arith.constant 0 : index
      %c0_25 = arith.constant 0 : index
      %42 = vector.load %arg7[%c0_24, %c0_25] : memref<16x128xf32, #tpu.memory_space<vmem>>, vector<16x128xf32>
      %c0_26 = arith.constant 0 : index
      %c0_27 = arith.constant 0 : index
      %43 = vector.load %arg6[%c0_26, %c0_27] : memref<1x128xf32, #tpu.memory_space<vmem>>, vector<1x128xf32>
      %44 = vector.broadcast %43 : vector<1x128xf32> to vector<16x128xf32>
      %45 = arith.addf %42, %44 : vector<16x128xf32>
      %c0_28 = arith.constant 0 : index
      %c0_29 = arith.constant 0 : index
      %46 = vector.load %arg7[%c0_28, %c0_29] : memref<16x128xf32, #tpu.memory_space<vmem>>, vector<16x128xf32>
      tpu.vector_store %arg7[%c0_28, %c0_29], %45 {strides = array<i32>} : memref<16x128xf32, #tpu.memory_space<vmem>>, vector<16x128xf32>,
    } else {
    }
    return
  }
  func.func @transform_0(%arg0: i32) -> (i32, i32) {
    %c0_i32 = arith.constant 0 : i32
    %c0_i32_0 = arith.constant 0 : i32
    %c0_i32_1 = arith.constant 0 : i32
    return %c0_i32, %c0_i32_0 : i32, i32
  }
  func.func @transform_1(%arg0: i32) -> (i32, i32) {
    %c0_i32 = arith.constant 0 : i32
    %c0_i32_0 = arith.constant 0 : i32
    return %c0_i32, %arg0 : i32, i32
  }
  func.func @transform_2(%arg0: i32) -> (i32, i32) {
    %c0_i32 = arith.constant 0 : i32
    %c0_i32_0 = arith.constant 0 : i32
    return %c0_i32, %arg0 : i32, i32
  }
  func.func @transform_3(%arg0: i32) -> (i32, i32) {
    %c0_i32 = arith.constant 0 : i32
    %c0_i32_0 = arith.constant 0 : i32
    return %c0_i32, %arg0 : i32, i32
  }
  func.func @transform_4(%arg0: i32) -> (i32, i32) {
    %c0_i32 = arith.constant 0 : i32
    %c0_i32_0 = arith.constant 0 : i32
    return %arg0, %c0_i32 : i32, i32
  }
  func.func @transform_5(%arg0: i32) -> (i32, i32) {
    %c0_i32 = arith.constant 0 : i32
    %c0_i32_0 = arith.constant 0 : i32
    %c0_i32_1 = arith.constant 0 : i32
    return %c0_i32, %c0_i32_0 : i32, i32
  }
  func.func @transform_6(%arg0: i32) -> (i32, i32) {
    %c0_i32 = arith.constant 0 : i32
    %c0_i32_0 = arith.constant 0 : i32
    %c0_i32_1 = arith.constant 0 : i32
    return %c0_i32, %c0_i32_0 : i32, i32
  }
}

</mosaic_0001>

<llo_original>
// kernel: _forward_impl.1
$region0: #{_forward_impl.1}
  #allocation0 [shape = 'u32[]', space=smem, size = 0x4, offset = 0x4, fixed_abs, tag = 'smem constant byte address 0x4 - core index']
  #allocation1 [shape = 'u32[72,128]{1,0:T(1,128)}', space=vmem, size = 0x9000, scoped, tag = 'internal scratch']
  %s0 = inlined_call_operand.vmem [shape: bf16[16,48], index: 0, kind: input, shape index: {}]
  %s1 = inlined_call_operand.hbm [shape: bf16[48,256], index: 1, kind: input, shape index: {}]
  %s2 = inlined_call_operand.vmem [shape: f32[1,256], index: 2, kind: input, shape index: {}]
  %s3 = inlined_call_operand.vmem [shape: f32[1,256], index: 3, kind: input, shape index: {}]
  %s4 = inlined_call_operand.hbm [shape: bf16[256,128], index: 4, kind: input, shape index: {}]
  %s5 = inlined_call_operand.vmem [shape: f32[1,128], index: 5, kind: input, shape index: {}]
  %s6 = inlined_call_operand.hbm [shape: f32[16,128], index: 6, kind: output, shape index: {}]
  %s7 = sld [smem:[#allocation0]]
  $region50: #{_forward_impl.1} parent=0
    _
  %s9 = ssub.s32 1, %s7
  %s10 = scalar_select 0, %s9, %s7
  $region1: #{_forward_impl.1} parent=0
    #allocation2 [shape = 'u8[24576]{0}', space=vmem, size = 0x6000, scoped, tag = 'input window, operand 1, single buffered']
    #allocation3 [shape = 's32[1]{0}', space=sflag, size = 0x4, scoped, tag = 'scoped memory for _forward_impl.1']
    #allocation4 [shape = 's32[1]{0}', space=sflag, size = 0x4, scoped, tag = 'scoped memory for _forward_impl.1']
    #allocation5 [shape = 'u8[65536]{0}', space=vmem, size = 0x10000, scoped, tag = 'input window, operand 4, single buffered']
    #allocation6 [shape = 's32[1]{0}', space=sflag, size = 0x4, scoped, tag = 'scoped memory for _forward_impl.1']
    #allocation7 [shape = 'u8[8192]{0}', space=vmem, size = 0x2000, scoped, tag = 'output window, operand 0, single buffered']
    %11 = vsyncpa [#allocation3], 0
    %12 = vsyncpa [#allocation6], 0
    %13 = vsyncpa [#allocation4], 0
    // Predicated region
    $region2: #{_forward_impl.1} parent=1 // pred_check
      _
    $region3: #{_forward_impl.1} parent=1 // pred_check_branch
      %15 = sbr.rel (0) target = $region5
    $region4: #{_forward_impl.1} parent=1 // pred_region
      _
    $region5: #{_forward_impl.1} parent=1 // pred_fallthru
      _
    // Predicated region
    $region6: #{_forward_impl.1} parent=1 // pred_check
      _
    $region7: #{_forward_impl.1} parent=1 // pred_check_branch
      %17 = sbr.rel (0) target = $region9
    $region8: #{_forward_impl.1} parent=1 // pred_region
      %19 = vsyncadd [#allocation3], 0
      %s20 = sshll.u32 %s1, 4
      %s21 = int_to_ptr.hbm [resolvable:$true] %s20
      %s22 = sshll.u32 [#allocation2], 4
      %s23 = int_to_ptr.vmem [resolvable:$true] %s22
      %28 = dma.hbm_to_vmem [thread:$0]  %s21, 768, %s23, [#allocation3], 128, 128, 8
    $region9: #{_forward_impl.1} parent=1 // pred_fallthru
      _
    // Predicated region
    $region10: #{_forward_impl.1} parent=1 // pred_check
      _
    $region11: #{_forward_impl.1} parent=1 // pred_check_branch
      %30 = sbr.rel (0) target = $region13
    $region12: #{_forward_impl.1} parent=1 // pred_region
      _
    $region13: #{_forward_impl.1} parent=1 // pred_fallthru
      _
    // Predicated region
    $region14: #{_forward_impl.1} parent=1 // pred_check
      _
    $region15: #{_forward_impl.1} parent=1 // pred_check_branch
      %32 = sbr.rel (0) target = $region17
    $region16: #{_forward_impl.1} parent=1 // pred_region
      _
    $region17: #{_forward_impl.1} parent=1 // pred_fallthru
      _
    // Predicated region
    $region18: #{_forward_impl.1} parent=1 // pred_check
      _
    $region19: #{_forward_impl.1} parent=1 // pred_check_branch
      %34 = sbr.rel (0) target = $region21
    $region20: #{_forward_impl.1} parent=1 // pred_region
      %36 = vsyncadd [#allocation6], 0
      %s37 = sshll.u32 %s4, 4
      %s38 = int_to_ptr.hbm [resolvable:$true] %s37
      %s39 = sshll.u32 [#allocation5], 4
      %s40 = int_to_ptr.vmem [resolvable:$true] %s39
      %45 = dma.hbm_to_vmem [thread:$0]  %s38, 2048, %s40, [#allocation6], 64, 64, 4
    $region21: #{_forward_impl.1} parent=1 // pred_fallthru
      _
    // Predicated region
    $region22: #{_forward_impl.1} parent=1 // pred_check
      _
    $region23: #{_forward_impl.1} parent=1 // pred_check_branch
      %47 = sbr.rel (0) target = $region25
    $region24: #{_forward_impl.1} parent=1 // pred_region
      _
    $region25: #{_forward_impl.1} parent=1 // pred_fallthru
      _
    // Predicated region
    $region26: #{_forward_impl.1} parent=1 // pred_check
      _
    $region27: #{_forward_impl.1} parent=1 // pred_check_branch
      %49 = sbr.rel (0) target = $region29
    $region28: #{_forward_impl.1} parent=1 // pred_region
      %51 = dma.done [#allocation3], 768
    $region29: #{_forward_impl.1} parent=1 // pred_fallthru
      _
    // Predicated region
    $region30: #{_forward_impl.1} parent=1 // pred_check
      _
    $region31: #{_forward_impl.1} parent=1 // pred_check_branch
      %53 = sbr.rel (0) target = $region33
    $region32: #{_forward_impl.1} parent=1 // pred_region
      %55 = dma.done [#allocation6], 2048
    $region33: #{_forward_impl.1} parent=1 // pred_fallthru
      _
    %p57 = scmp.eq.s32.totalorder 0, 0
    // Predicated region
    $region34: #{_forward_impl.1} parent=1 // pred_check
      %p58 = pneg %p57
    $region35: #{_forward_impl.1} parent=1 // pred_check_branch
      %60 = sbr.rel (%p58) target = $region37
    $region36: #{_forward_impl.1} parent=1 // pred_region
      %61 = vst [vmem:[#allocation7] sm:$0xff] 0.0
      %62 = vst [vmem:[#allocation7 + $0x8] sm:$0xff] 0.0
    $region37: #{_forward_impl.1} parent=1 // pred_fallthru
      _
    %v63 = vld [vmem:[%s0] sm:$0xf]
    %v64 = vld [vmem:[%s0 + $0x4] sm:$0xf]
    %v65 = vld [vmem:[#allocation2] sm:$0xff]
    %v66 = vld [vmem:[#allocation2 + $0x8] sm:$0xff]
    %v67 = vld [vmem:[#allocation2 + $0x10] sm:$0xff]
    %v68 = vld [vmem:[#allocation2 + $0x18] sm:$0xff]
    %v69 = vld [vmem:[#allocation2 + $0x20] sm:$0xff]
    %v70 = vld [vmem:[#allocation2 + $0x28] sm:$0xff]
    %v73 = vunpack.c.l.b16 %v63
    %v74 = vunpack.c.l.b16 %v64
    %v75 = vpack.c.b16 %v74, %v73
    %v82 = vunpack.c.l.b16 %v65
    %v83 = vunpack.c.h.b16 %v65
    %v84 = vunpack.c.l.b16 %v66
    %v85 = vunpack.c.h.b16 %v66
    %v86 = vunpack.c.l.b16 %v67
    %v87 = vunpack.c.h.b16 %v67
    %v88 = vunpack.c.l.b16 %v68
    %v89 = vunpack.c.h.b16 %v68
    %v90 = vunpack.c.l.b16 %v69
    %v91 = vunpack.c.h.b16 %v69
    %v92 = vunpack.c.l.b16 %v70
    %v93 = vunpack.c.h.b16 %v70
    %v94 = vpack.c.b16 %v84, %v82
    %v95 = vpack.c.b16 %v85, %v83
    %v96 = vpack.c.b16 %v88, %v86
    %v97 = vpack.c.b16 %v89, %v87
    %v98 = vpack.c.b16 %v92, %v90
    %v99 = vpack.c.b16 %v93, %v91
    %vm106 = vcmask 392192
    %v108 = vsel %vm106, %v75, 0
    %110 = vmatpush.bf16.msra.mxu0 0
    %111 = vmatpush.bf16.msra.mxu0 0
    %112 = vmatpush.bf16.msra.mxu0 0
    %113 = vmatpush.bf16.msra.mxu0 0
    %114 = vmatpush.bf16.msra.mxu0 0
    %115 = vmatpush.bf16.msra.mxu0 %v98
    %116 = vmatpush.bf16.msra.mxu0 %v96
    %117 = vmatpush.bf16.msra.mxu0 %v94
    %118 = vmatmul.bf16.gmra.mxu0 %v108
    %v119 = vpop.f32.mrf.mxu0
    %v120 = vadd.f32 0.0, %v119
    %v121 = vpop.f32.mrf.mxu0
    %v122 = vadd.f32 0.0, %v121
    %123 = vdwg.mxu0
    %124 = vmatpush.bf16.msra.mxu0 0
    %125 = vmatpush.bf16.msra.mxu0 0
    %126 = vmatpush.bf16.msra.mxu0 0
    %127 = vmatpush.bf16.msra.mxu0 0
    %128 = vmatpush.bf16.msra.mxu0 0
    %129 = vmatpush.bf16.msra.mxu0 %v99
    %130 = vmatpush.bf16.msra.mxu0 %v97
    %131 = vmatpush.bf16.msra.mxu0 %v95
    %132 = vmatmul.bf16.gmra.mxu0 %v108
    %v133 = vpop.f32.mrf.mxu0
    %v134 = vadd.f32 0.0, %v133
    %v135 = vpop.f32.mrf.mxu0
    %v136 = vadd.f32 0.0, %v135
    %137 = vdwg.mxu0
    %v138 = vadd.f32 %v120, %v122
    %v139 = vrot.slane %v138, 4
    %v140 = vadd.f32 %v138, %v139
    %v141 = vrot.slane %v140, 2
    %v142 = vadd.f32 %v140, %v141
    %v143 = vrot.slane %v142, 1
    %v144 = vadd.f32 %v142, %v143
    %v145 = vadd.f32 %v134, %v136
    %v146 = vrot.slane %v145, 4
    %v147 = vadd.f32 %v145, %v146
    %v148 = vrot.slane %v147, 2
    %v149 = vadd.f32 %v147, %v148
    %v150 = vrot.slane %v149, 1
    %v151 = vadd.f32 %v149, %v150
    %v152 = vrcp.pop 16.0
    %v153 = vmul.f32 16.0, %v152
    %v154 = vsub.f32 1.0, %v153
    %v155 = vmul.f32 %v152, %v154
    %v156 = vadd.f32 %v152, %v155
    %vm157 = vweird.f32 %v152
    %v158 = vsel %vm157, %v152, %v156
    %v159 = vmul.f32 %v144, %v158
    %v160 = vmul.f32 %v151, %v158
    %v161 = vmul.f32 %v120, %v120
    %v162 = vmul.f32 %v134, %v134
    %v163 = vmul.f32 %v122, %v122
    %v164 = vmul.f32 %v136, %v136
    %v165 = vadd.f32 %v161, %v163
    %v166 = vrot.slane %v165, 4
    %v167 = vadd.f32 %v165, %v166
    %v168 = vrot.slane %v167, 2
    %v169 = vadd.f32 %v167, %v168
    %v170 = vrot.slane %v169, 1
    %v171 = vadd.f32 %v169, %v170
    %v172 = vadd.f32 %v162, %v164
    %v173 = vrot.slane %v172, 4
    %v174 = vadd.f32 %v172, %v173
    %v175 = vrot.slane %v174, 2
    %v176 = vadd.f32 %v174, %v175
    %v177 = vrot.slane %v176, 1
    %v178 = vadd.f32 %v176, %v177
    %v179 = vmul.f32 %v171, %v158
    %v180 = vmul.f32 %v178, %v158
    %v181 = vmul.f32 %v159, %v159
    %v182 = vmul.f32 %v160, %v160
    %v183 = vsub.f32 %v179, %v181
    %v184 = vsub.f32 %v180, %v182
    %v185 = vmax.f32 %v183, 0.0
    %v186 = vmax.f32 %v184, 0.0
    %v187 = vld [vmem:[%s2] sm:$0x3]
    %v188 = vadd.f32 %v185, 1e-05
    %v189 = vadd.f32 %v186, 1e-05
    %v190 = vrsqrt.pop %v188
    %v191 = vmul.f32 %v190, %v188
    %v192 = vmul.f32 %v191, %v190
    %v193 = vmul.f32 0.5, %v192
    %v194 = vsub.f32 1.5, %v193
    %v195 = vmul.f32 %v190, %v194
    %vm196 = vweird.f32 %v188
    %vm197 = vweird.f32 %v190
    %vm198 = vmor %vm196, %vm197
    %v199 = vsel %vm198, %v190, %v195
    %v200 = vrsqrt.pop %v189
    %v201 = vmul.f32 %v200, %v189
    %v202 = vmul.f32 %v201, %v200
    %v203 = vmul.f32 0.5, %v202
    %v204 = vsub.f32 1.5, %v203
    %v205 = vmul.f32 %v200, %v204
    %vm206 = vweird.f32 %v189
    %vm207 = vweird.f32 %v200
    %vm208 = vmor %vm206, %vm207
    %v209 = vsel %vm208, %v200, %v205
    %v212 = vrot.slane %v209, 7
    %vm213 = vcmask 1040384
    %v214 = vsel %vm213, %v199, %v212
    %v216 = vmul.f32 %v187, %v214
    %v217 = vld [vmem:[%s3] sm:$0x3]
    %v219 = vperm.slane %v216, 0
    %v220 = vperm.slane %v216, 1
    %v223 = vmul.f32 %v159, %v219
    %v224 = vmul.f32 %v160, %v220
    %v227 = vrot.slane %v224, 7
    %v228 = vsel %vm213, %v223, %v227
    %v230 = vsub.f32 %v217, %v228
    %v231 = vmul.f32 %v120, %v219
    %v232 = vmul.f32 %v134, %v220
    %v233 = vmul.f32 %v122, %v219
    %v234 = vmul.f32 %v136, %v220
    %v236 = vperm.slane %v230, 0
    %v237 = vperm.slane %v230, 1
    %v240 = vadd.f32 %v231, %v236
    %v241 = vadd.f32 %v232, %v237
    %v242 = vadd.f32 %v233, %v236
    %v243 = vadd.f32 %v234, %v237
    %v244 = vmax.f32 %v240, 0.0
    %v245 = vmax.f32 %v241, 0.0
    %v246 = vmax.f32 %v242, 0.0
    %v247 = vmax.f32 %v243, 0.0
    %v248 = vld [vmem:[#allocation7] sm:$0xff]
    %v249 = vld [vmem:[#allocation7 + $0x8] sm:$0xff]
    %v250 = vpack.c.bf16 %v246, %v244
    %v251 = vpack.c.bf16 %v247, %v245
    %v252 = vld [vmem:[#allocation5] sm:$0xf]
    %v253 = vld [vmem:[#allocation5 + $0x4] sm:$0xf]
    %v254 = vld [vmem:[#allocation5 + $0x8] sm:$0xf]
    %v255 = vld [vmem:[#allocation5 + $0xc] sm:$0xf]
    %v256 = vld [vmem:[#allocation5 + $0x10] sm:$0xf]
    %v257 = vld [vmem:[#allocation5 + $0x14] sm:$0xf]
    %v258 = vld [vmem:[#allocation5 + $0x18] sm:$0xf]
    %v259 = vld [vmem:[#allocation5 + $0x1c] sm:$0xf]
    %v260 = vld [vmem:[#allocation5 + $0x20] sm:$0xf]
    %v261 = vld [vmem:[#allocation5 + $0x24] sm:$0xf]
    %v262 = vld [vmem:[#allocation5 + $0x28] sm:$0xf]
    %v263 = vld [vmem:[#allocation5 + $0x2c] sm:$0xf]
    %v264 = vld [vmem:[#allocation5 + $0x30] sm:$0xf]
    %v265 = vld [vmem:[#allocation5 + $0x34] sm:$0xf]
    %v266 = vld [vmem:[#allocation5 + $0x38] sm:$0xf]
    %v267 = vld [vmem:[#allocation5 + $0x3c] sm:$0xf]
    %v268 = vld [vmem:[#allocation5 + $0x40] sm:$0xf]
    %v269 = vld [vmem:[#allocation5 + $0x44] sm:$0xf]
    %v270 = vld [vmem:[#allocation5 + $0x48] sm:$0xf]
    %v271 = vld [vmem:[#allocation5 + $0x4c] sm:$0xf]
    %v272 = vld [vmem:[#allocation5 + $0x50] sm:$0xf]
    %v273 = vld [vmem:[#allocation5 + $0x54] sm:$0xf]
    %v274 = vld [vmem:[#allocation5 + $0x58] sm:$0xf]
    %v275 = vld [vmem:[#allocation5 + $0x5c] sm:$0xf]
    %v276 = vld [vmem:[#allocation5 + $0x60] sm:$0xf]
    %v277 = vld [vmem:[#allocation5 + $0x64] sm:$0xf]
    %v278 = vld [vmem:[#allocation5 + $0x68] sm:$0xf]
    %v279 = vld [vmem:[#allocation5 + $0x6c] sm:$0xf]
    %v280 = vld [vmem:[#allocation5 + $0x70] sm:$0xf]
    %v281 = vld [vmem:[#allocation5 + $0x74] sm:$0xf]
    %v282 = vld [vmem:[#allocation5 + $0x78] sm:$0xf]
    %v283 = vld [vmem:[#allocation5 + $0x7c] sm:$0xf]
    %v316 = vunpack.c.l.b16 %v252
    %v317 = vunpack.c.l.b16 %v253
    %v318 = vunpack.c.l.b16 %v254
    %v319 = vunpack.c.l.b16 %v255
    %v320 = vunpack.c.l.b16 %v256
    %v321 = vunpack.c.l.b16 %v257
    %v322 = vunpack.c.l.b16 %v258
    %v323 = vunpack.c.l.b16 %v259
    %v324 = vunpack.c.l.b16 %v260
    %v325 = vunpack.c.l.b16 %v261
    %v326 = vunpack.c.l.b16 %v262
    %v327 = vunpack.c.l.b16 %v263
    %v328 = vunpack.c.l.b16 %v264
    %v329 = vunpack.c.l.b16 %v265
    %v330 = vunpack.c.l.b16 %v266
    %v331 = vunpack.c.l.b16 %v267
    %v332 = vunpack.c.l.b16 %v268
    %v333 = vunpack.c.l.b16 %v269
    %v334 = vunpack.c.l.b16 %v270
    %v335 = vunpack.c.l.b16 %v271
    %v336 = vunpack.c.l.b16 %v272
    %v337 = vunpack.c.l.b16 %v273
    %v338 = vunpack.c.l.b16 %v274
    %v339 = vunpack.c.l.b16 %v275
    %v340 = vunpack.c.l.b16 %v276
    %v341 = vunpack.c.l.b16 %v277
    %v342 = vunpack.c.l.b16 %v278
    %v343 = vunpack.c.l.b16 %v279
    %v344 = vunpack.c.l.b16 %v280
    %v345 = vunpack.c.l.b16 %v281
    %v346 = vunpack.c.l.b16 %v282
    %v347 = vunpack.c.l.b16 %v283
    %v348 = vpack.c.b16 %v317, %v316
    %v349 = vpack.c.b16 %v319, %v318
    %v350 = vpack.c.b16 %v321, %v320
    %v351 = vpack.c.b16 %v323, %v322
    %v352 = vpack.c.b16 %v325, %v324
    %v353 = vpack.c.b16 %v327, %v326
    %v354 = vpack.c.b16 %v329, %v328
    %v355 = vpack.c.b16 %v331, %v330
    %v356 = vpack.c.b16 %v333, %v332
    %v357 = vpack.c.b16 %v335, %v334
    %v358 = vpack.c.b16 %v337, %v336
    %v359 = vpack.c.b16 %v339, %v338
    %v360 = vpack.c.b16 %v341, %v340
    %v361 = vpack.c.b16 %v343, %v342
    %v362 = vpack.c.b16 %v345, %v344
    %v363 = vpack.c.b16 %v347, %v346
    %380 = vmatpush.bf16.msra.mxu0 %v355
    %381 = vmatpush.bf16.msra.mxu0 %v354
    %382 = vmatpush.bf16.msra.mxu0 %v353
    %383 = vmatpush.bf16.msra.mxu0 %v352
    %384 = vmatpush.bf16.msra.mxu0 %v351
    %385 = vmatpush.bf16.msra.mxu0 %v350
    %386 = vmatpush.bf16.msra.mxu0 %v349
    %387 = vmatpush.bf16.msra.mxu0 %v348
    %388 = vmatmul.bf16.gmra.mxu0 %v250
    %v389 = vpop.f32.mrf.mxu0
    %v390 = vadd.f32 0.0, %v389
    %v391 = vpop.f32.mrf.mxu0
    %v392 = vadd.f32 0.0, %v391
    %393 = vdwg.mxu0
    %394 = vmatpush.bf16.msra.mxu0 %v363
    %395 = vmatpush.bf16.msra.mxu0 %v362
    %396 = vmatpush.bf16.msra.mxu0 %v361
    %397 = vmatpush.bf16.msra.mxu0 %v360
    %398 = vmatpush.bf16.msra.mxu0 %v359
    %399 = vmatpush.bf16.msra.mxu0 %v358
    %400 = vmatpush.bf16.msra.mxu0 %v357
    %401 = vmatpush.bf16.msra.mxu0 %v356
    %402 = vmatmul.bf16.gmra.mxu0 %v251
    %v403 = vpop.f32.mrf.mxu0
    %v404 = vadd.f32 %v390, %v403
    %v405 = vpop.f32.mrf.mxu0
    %v406 = vadd.f32 %v392, %v405
    %407 = vdwg.mxu0
    %v408 = vadd.f32 %v248, %v404
    %v409 = vadd.f32 %v249, %v406
    %410 = vst [vmem:[#allocation7] sm:$0xff] %v408
    %411 = vst [vmem:[#allocation7 + $0x8] sm:$0xff] %v409
    // Predicated region
    $region38: #{_forward_impl.1} parent=1 // pred_check
      %p412 = pneg %p57
    $region39: #{_forward_impl.1} parent=1 // pred_check_branch
      %414 = sbr.rel (%p412) target = $region41
    $region40: #{_forward_impl.1} parent=1 // pred_region
      %v415 = vld [vmem:[#allocation7] sm:$0xff]
      %v416 = vld [vmem:[#allocation7 + $0x8] sm:$0xff]
      %v417 = vld [vmem:[%s5] sm:$0x1]
      %v419 = vperm.slane %v417, 0
      %v421 = vadd.f32 %v415, %v419
      %v422 = vadd.f32 %v416, %v419
      %423 = vst [vmem:[#allocation7] sm:$0xff] %v421
      %424 = vst [vmem:[#allocation7 + $0x8] sm:$0xff] %v422
    $region41: #{_forward_impl.1} parent=1 // pred_fallthru
      _
    // Predicated region
    $region42: #{_forward_impl.1} parent=1 // pred_check
      _
    $region43: #{_forward_impl.1} parent=1 // pred_check_branch
      %426 = sbr.rel (0) target = $region45
    $region44: #{_forward_impl.1} parent=1 // pred_region
      %428 = vsyncadd [#allocation4], 0
      %s429 = sshll.u32 [#allocation7], 4
      %s430 = int_to_ptr.vmem [resolvable:$true] %s429
      %s431 = sshll.u32 %s6, 4
      %s432 = int_to_ptr.hbm [resolvable:$true] %s431
      %437 = dma.vmem_to_hbm [thread:$0]  %s430, 256, %s432, [#allocation4], 128, 128, 8
    $region45: #{_forward_impl.1} parent=1 // pred_fallthru
      _
    // Predicated region
    $region46: #{_forward_impl.1} parent=1 // pred_check
      _
    $region47: #{_forward_impl.1} parent=1 // pred_check_branch
      %439 = sbr.rel (0) target = $region49
    $region48: #{_forward_impl.1} parent=1 // pred_region
      %441 = dma.done [#allocation4], 256
    $region49: #{_forward_impl.1} parent=1 // pred_fallthru
      _
    %442 = vsyncpa [#allocation3], 1
    %443 = vsyncpa [#allocation6], 1
    %444 = vsyncpa [#allocation4], 1

// kernel: _forward_impl.1
$region0: #{_forward_impl.1}
  #allocation0 [shape = 'u32[]', space=smem, size = 0x4, offset = 0x4, fixed_abs, tag = 'smem constant byte address 0x4 - core index']
  #allocation1 [shape = 'u32[72,128]{1,0:T(1,128)}', space=vmem, size = 0x9000, scoped, tag = 'internal scratch']
  %s0 = inlined_call_operand.vmem [shape: bf16[16,48], index: 0, kind: input, shape index: {}]
  %s1 = inlined_call_operand.hbm [shape: bf16[48,256], index: 1, kind: input, shape index: {}]
  %s2 = inlined_call_operand.vmem [shape: f32[1,256], index: 2, kind: input, shape index: {}]
  %s3 = inlined_call_operand.vmem [shape: f32[1,256], index: 3, kind: input, shape index: {}]
  %s4 = inlined_call_operand.hbm [shape: bf16[256,128], index: 4, kind: input, shape index: {}]
  %s5 = inlined_call_operand.vmem [shape: f32[1,128], index: 5, kind: input, shape index: {}]
  %s6 = inlined_call_operand.hbm [shape: f32[16,128], index: 6, kind: output, shape index: {}]
  %s7 = sld [smem:[#allocation0]]
  $region50: #{_forward_impl.1} parent=0
    _
  %s9 = ssub.s32 1, %s7
  %s10 = scalar_select 0, %s9, %s7
  $region1: #{_forward_impl.1} parent=0
    #allocation2 [shape = 'u8[24576]{0}', space=vmem, size = 0x6000, scoped, tag = 'input window, operand 1, single buffered']
    #allocation3 [shape = 's32[1]{0}', space=sflag, size = 0x4, scoped, tag = 'scoped memory for _forward_impl.1']
    #allocation4 [shape = 's32[1]{0}', space=sflag, size = 0x4, scoped, tag = 'scoped memory for _forward_impl.1']
    #allocation5 [shape = 'u8[65536]{0}', space=vmem, size = 0x10000, scoped, tag = 'input window, operand 4, single buffered']
    #allocation6 [shape = 's32[1]{0}', space=sflag, size = 0x4, scoped, tag = 'scoped memory for _forward_impl.1']
    #allocation7 [shape = 'u8[8192]{0}', space=vmem, size = 0x2000, scoped, tag = 'output window, operand 0, single buffered']
    %11 = vsyncpa [#allocation3], 0
    %12 = vsyncpa [#allocation6], 0
    %13 = vsyncpa [#allocation4], 0
    // Predicated region
    $region2: #{_forward_impl.1} parent=1 // pred_check
      _
    $region3: #{_forward_impl.1} parent=1 // pred_check_branch
      %15 = sbr.rel (0) target = $region5
    $region4: #{_forward_impl.1} parent=1 // pred_region
      _
    $region5: #{_forward_impl.1} parent=1 // pred_fallthru
      _
    // Predicated region
    $region6: #{_forward_impl.1} parent=1 // pred_check
      _
    $region7: #{_forward_impl.1} parent=1 // pred_check_branch
      %17 = sbr.rel (0) target = $region9
    $region8: #{_forward_impl.1} parent=1 // pred_region
      %19 = vsyncadd [#allocation3], 0
      %s20 = sshll.u32 %s1, 4
      %s21 = int_to_ptr.hbm [resolvable:$true] %s20
      %s22 = sshll.u32 [#allocation2], 4
      %s23 = int_to_ptr.vmem [resolvable:$true] %s22
      %28 = dma.hbm_to_vmem [thread:$0]  %s21, 768, %s23, [#allocation3], 128, 128, 8
    $region9: #{_forward_impl.1} parent=1 // pred_fallthru
      _
    // Predicated region
    $region10: #{_forward_impl.1} parent=1 // pred_check
      _
    $region11: #{_forward_impl.1} parent=1 // pred_check_branch
      %30 = sbr.rel (0) target = $region13
    $region12: #{_forward_impl.1} parent=1 // pred_region
      _
    $region13: #{_forward_impl.1} parent=1 // pred_fallthru
      _
    // Predicated region
    $region14: #{_forward_impl.1} parent=1 // pred_check
      _
    $region15: #{_forward_impl.1} parent=1 // pred_check_branch
      %32 = sbr.rel (0) target = $region17
    $region16: #{_forward_impl.1} parent=1 // pred_region
      _
    $region17: #{_forward_impl.1} parent=1 // pred_fallthru
      _
    // Predicated region
    $region18: #{_forward_impl.1} parent=1 // pred_check
      _
    $region19: #{_forward_impl.1} parent=1 // pred_check_branch
      %34 = sbr.rel (0) target = $region21
    $region20: #{_forward_impl.1} parent=1 // pred_region
      %36 = vsyncadd [#allocation6], 0
      %s37 = sshll.u32 %s4, 4
      %s38 = int_to_ptr.hbm [resolvable:$true] %s37
      %s39 = sshll.u32 [#allocation5], 4
      %s40 = int_to_ptr.vmem [resolvable:$true] %s39
      %45 = dma.hbm_to_vmem [thread:$0]  %s38, 2048, %s40, [#allocation6], 64, 64, 4
    $region21: #{_forward_impl.1} parent=1 // pred_fallthru
      _
    // Predicated region
    $region22: #{_forward_impl.1} parent=1 // pred_check
      _
    $region23: #{_forward_impl.1} parent=1 // pred_check_branch
      %47 = sbr.rel (0) target = $region25
    $region24: #{_forward_impl.1} parent=1 // pred_region
      _
    $region25: #{_forward_impl.1} parent=1 // pred_fallthru
      _
    // Predicated region
    $region26: #{_forward_impl.1} parent=1 // pred_check
      _
    $region27: #{_forward_impl.1} parent=1 // pred_check_branch
      %49 = sbr.rel (0) target = $region29
    $region28: #{_forward_impl.1} parent=1 // pred_region
      %51 = dma.done [#allocation3], 768
    $region29: #{_forward_impl.1} parent=1 // pred_fallthru
      _
    // Predicated region
    $region30: #{_forward_impl.1} parent=1 // pred_check
      _
    $region31: #{_forward_impl.1} parent=1 // pred_check_branch
      %53 = sbr.rel (0) target = $region33
    $region32: #{_forward_impl.1} parent=1 // pred_region
      %55 = dma.done [#allocation6], 2048
    $region33: #{_forward_impl.1} parent=1 // pred_fallthru
      _
    %p57 = scmp.eq.s32.totalorder 0, 0
    // Predicated region
    $region34: #{_forward_impl.1} parent=1 // pred_check
      %p58 = pneg %p57
    $region35: #{_forward_impl.1} parent=1 // pred_check_branch
      %60 = sbr.rel (%p58) target = $region37
    $region36: #{_forward_impl.1} parent=1 // pred_region
      %61 = vst [vmem:[#allocation7] sm:$0xff] 0.0
      %62 = vst [vmem:[#allocation7 + $0x8] sm:$0xff] 0.0
    $region37: #{_forward_impl.1} parent=1 // pred_fallthru
      _
    %v63 = vld [vmem:[%s0] sm:$0xf]
    %v64 = vld [vmem:[%s0 + $0x4] sm:$0xf]
    %v65 = vld [vmem:[#allocation2] sm:$0xff]
    %v66 = vld [vmem:[#allocation2 + $0x8] sm:$0xff]
    %v67 = vld [vmem:[#allocation2 + $0x10] sm:$0xff]
    %v68 = vld [vmem:[#allocation2 + $0x18] sm:$0xff]
    %v69 = vld [vmem:[#allocation2 + $0x20] sm:$0xff]
    %v70 = vld [vmem:[#allocation2 + $0x28] sm:$0xff]
    %v73 = vunpack.c.l.b16 %v63
    %v74 = vunpack.c.l.b16 %v64
    %v75 = vpack.c.b16 %v74, %v73
    %v82 = vunpack.c.l.b16 %v65
    %v83 = vunpack.c.h.b16 %v65
    %v84 = vunpack.c.l.b16 %v66
    %v85 = vunpack.c.h.b16 %v66
    %v86 = vunpack.c.l.b16 %v67
    %v87 = vunpack.c.h.b16 %v67
    %v88 = vunpack.c.l.b16 %v68
    %v89 = vunpack.c.h.b16 %v68
    %v90 = vunpack.c.l.b16 %v69
    %v91 = vunpack.c.h.b16 %v69
    %v92 = vunpack.c.l.b16 %v70
    %v93 = vunpack.c.h.b16 %v70
    %v94 = vpack.c.b16 %v84, %v82
    %v95 = vpack.c.b16 %v85, %v83
    %v96 = vpack.c.b16 %v88, %v86
    %v97 = vpack.c.b16 %v89, %v87
    %v98 = vpack.c.b16 %v92, %v90
    %v99 = vpack.c.b16 %v93, %v91
    %vm106 = vcmask 392192
    %v108 = vsel %vm106, %v75, 0
    %110 = vmatpush.bf16.msra.mxu0 0
    %111 = vmatpush.bf16.msra.mxu0 0
    %112 = vmatpush.bf16.msra.mxu0 0
    %113 = vmatpush.bf16.msra.mxu0 0
    %114 = vmatpush.bf16.msra.mxu0 0
    %115 = vmatpush.bf16.msra.mxu0 %v98
    %116 = vmatpush.bf16.msra.mxu0 %v96
    %117 = vmatpush.bf16.msra.mxu0 %v94
    %118 = vmatmul.bf16.gmra.mxu0 %v108
    %v119 = vpop.f32.mrf.mxu0
    %v120 = vadd.f32 0.0, %v119
    %v121 = vpop.f32.mrf.mxu0
    %v122 = vadd.f32 0.0, %v121
    %123 = vdwg.mxu0
    %124 = vmatpush.bf16.msra.mxu0 0
    %125 = vmatpush.bf16.msra.mxu0 0
    %126 = vmatpush.bf16.msra.mxu0 0
    %127 = vmatpush.bf16.msra.mxu0 0
    %128 = vmatpush.bf16.msra.mxu0 0
    %129 = vmatpush.bf16.msra.mxu0 %v99
    %130 = vmatpush.bf16.msra.mxu0 %v97
    %131 = vmatpush.bf16.msra.mxu0 %v95
    %132 = vmatmul.bf16.gmra.mxu0 %v108
    %v133 = vpop.f32.mrf.mxu0
    %v134 = vadd.f32 0.0, %v133
    %v135 = vpop.f32.mrf.mxu0
    %v136 = vadd.f32 0.0, %v135
    %137 = vdwg.mxu0
    %v138 = vadd.f32 %v120, %v122
    %v139 = vrot.slane %v138, 4
    %v140 = vadd.f32 %v138, %v139
    %v141 = vrot.slane %v140, 2
    %v142 = vadd.f32 %v140, %v141
    %v143 = vrot.slane %v142, 1
    %v144 = vadd.f32 %v142, %v143
    %v145 = vadd.f32 %v134, %v136
    %v146 = vrot.slane %v145, 4
    %v147 = vadd.f32 %v145, %v146
    %v148 = vrot.slane %v147, 2
    %v149 = vadd.f32 %v147, %v148
    %v150 = vrot.slane %v149, 1
    %v151 = vadd.f32 %v149, %v150
    %v152 = vrcp.pop 16.0
    %v153 = vmul.f32 16.0, %v152
    %v154 = vsub.f32 1.0, %v153
    %v155 = vmul.f32 %v152, %v154
    %v156 = vadd.f32 %v152, %v155
    %vm157 = vweird.f32 %v152
    %v158 = vsel %vm157, %v152, %v156
    %v159 = vmul.f32 %v144, %v158
    %v160 = vmul.f32 %v151, %v158
    %v161 = vmul.f32 %v120, %v120
    %v162 = vmul.f32 %v134, %v134
    %v163 = vmul.f32 %v122, %v122
    %v164 = vmul.f32 %v136, %v136
    %v165 = vadd.f32 %v161, %v163
    %v166 = vrot.slane %v165, 4
    %v167 = vadd.f32 %v165, %v166
    %v168 = vrot.slane %v167, 2
    %v169 = vadd.f32 %v167, %v168
    %v170 = vrot.slane %v169, 1
    %v171 = vadd.f32 %v169, %v170
    %v172 = vadd.f32 %v162, %v164
    %v173 = vrot.slane %v172, 4
    %v174 = vadd.f32 %v172, %v173
    %v175 = vrot.slane %v174, 2
    %v176 = vadd.f32 %v174, %v175
    %v177 = vrot.slane %v176, 1
    %v178 = vadd.f32 %v176, %v177
    %v179 = vmul.f32 %v171, %v158
    %v180 = vmul.f32 %v178, %v158
    %v181 = vmul.f32 %v159, %v159
    %v182 = vmul.f32 %v160, %v160
    %v183 = vsub.f32 %v179, %v181
    %v184 = vsub.f32 %v180, %v182
    %v185 = vmax.f32 %v183, 0.0
    %v186 = vmax.f32 %v184, 0.0
    %v187 = vld [vmem:[%s2] sm:$0x3]
    %v188 = vadd.f32 %v185, 1e-05
    %v189 = vadd.f32 %v186, 1e-05
    %v190 = vrsqrt.pop %v188
    %v191 = vmul.f32 %v190, %v188
    %v192 = vmul.f32 %v191, %v190
    %v193 = vmul.f32 0.5, %v192
    %v194 = vsub.f32 1.5, %v193
    %v195 = vmul.f32 %v190, %v194
    %vm196 = vweird.f32 %v188
    %vm197 = vweird.f32 %v190
    %vm198 = vmor %vm196, %vm197
    %v199 = vsel %vm198, %v190, %v195
    %v200 = vrsqrt.pop %v189
    %v201 = vmul.f32 %v200, %v189
    %v202 = vmul.f32 %v201, %v200
    %v203 = vmul.f32 0.5, %v202
    %v204 = vsub.f32 1.5, %v203
    %v205 = vmul.f32 %v200, %v204
    %vm206 = vweird.f32 %v189
    %vm207 = vweird.f32 %v200
    %vm208 = vmor %vm206, %vm207
    %v209 = vsel %vm208, %v200, %v205
    %v212 = vrot.slane %v209, 7
    %vm213 = vcmask 1040384
    %v214 = vsel %vm213, %v199, %v212
    %v216 = vmul.f32 %v187, %v214
    %v217 = vld [vmem:[%s3] sm:$0x3]
    %v219 = vperm.slane %v216, 0
    %v220 = vperm.slane %v216, 1
    %v223 = vmul.f32 %v159, %v219
    %v224 = vmul.f32 %v160, %v220
    %v227 = vrot.slane %v224, 7
    %v228 = vsel %vm213, %v223, %v227
    %v230 = vsub.f32 %v217, %v228
    %v231 = vmul.f32 %v120, %v219
    %v232 = vmul.f32 %v134, %v220
    %v233 = vmul.f32 %v122, %v219
    %v234 = vmul.f32 %v136, %v220
    %v236 = vperm.slane %v230, 0
    %v237 = vperm.slane %v230, 1
    %v240 = vadd.f32 %v231, %v236
    %v241 = vadd.f32 %v232, %v237
    %v242 = vadd.f32 %v233, %v236
    %v243 = vadd.f32 %v234, %v237
    %v244 = vmax.f32 %v240, 0.0
    %v245 = vmax.f32 %v241, 0.0
    %v246 = vmax.f32 %v242, 0.0
    %v247 = vmax.f32 %v243, 0.0
    %v248 = vld [vmem:[#allocation7] sm:$0xff]
    %v249 = vld [vmem:[#allocation7 + $0x8] sm:$0xff]
    %v250 = vpack.c.bf16 %v246, %v244
    %v251 = vpack.c.bf16 %v247, %v245
    %v252 = vld [vmem:[#allocation5] sm:$0xf]
    %v253 = vld [vmem:[#allocation5 + $0x4] sm:$0xf]
    %v254 = vld [vmem:[#allocation5 + $0x8] sm:$0xf]
    %v255 = vld [vmem:[#allocation5 + $0xc] sm:$0xf]
    %v256 = vld [vmem:[#allocation5 + $0x10] sm:$0xf]
    %v257 = vld [vmem:[#allocation5 + $0x14] sm:$0xf]
    %v258 = vld [vmem:[#allocation5 + $0x18] sm:$0xf]
    %v259 = vld [vmem:[#allocation5 + $0x1c] sm:$0xf]
    %v260 = vld [vmem:[#allocation5 + $0x20] sm:$0xf]
    %v261 = vld [vmem:[#allocation5 + $0x24] sm:$0xf]
    %v262 = vld [vmem:[#allocation5 + $0x28] sm:$0xf]
    %v263 = vld [vmem:[#allocation5 + $0x2c] sm:$0xf]
    %v264 = vld [vmem:[#allocation5 + $0x30] sm:$0xf]
    %v265 = vld [vmem:[#allocation5 + $0x34] sm:$0xf]
    %v266 = vld [vmem:[#allocation5 + $0x38] sm:$0xf]
    %v267 = vld [vmem:[#allocation5 + $0x3c] sm:$0xf]
    %v268 = vld [vmem:[#allocation5 + $0x40] sm:$0xf]
    %v269 = vld [vmem:[#allocation5 + $0x44] sm:$0xf]
    %v270 = vld [vmem:[#allocation5 + $0x48] sm:$0xf]
    %v271 = vld [vmem:[#allocation5 + $0x4c] sm:$0xf]
    %v272 = vld [vmem:[#allocation5 + $0x50] sm:$0xf]
    %v273 = vld [vmem:[#allocation5 + $0x54] sm:$0xf]
    %v274 = vld [vmem:[#allocation5 + $0x58] sm:$0xf]
    %v275 = vld [vmem:[#allocation5 + $0x5c] sm:$0xf]
    %v276 = vld [vmem:[#allocation5 + $0x60] sm:$0xf]
    %v277 = vld [vmem:[#allocation5 + $0x64] sm:$0xf]
    %v278 = vld [vmem:[#allocation5 + $0x68] sm:$0xf]
    %v279 = vld [vmem:[#allocation5 + $0x6c] sm:$0xf]
    %v280 = vld [vmem:[#allocation5 + $0x70] sm:$0xf]
    %v281 = vld [vmem:[#allocation5 + $0x74] sm:$0xf]
    %v282 = vld [vmem:[#allocation5 + $0x78] sm:$0xf]
    %v283 = vld [vmem:[#allocation5 + $0x7c] sm:$0xf]
    %v316 = vunpack.c.l.b16 %v252
    %v317 = vunpack.c.l.b16 %v253
    %v318 = vunpack.c.l.b16 %v254
    %v319 = vunpack.c.l.b16 %v255
    %v320 = vunpack.c.l.b16 %v256
    %v321 = vunpack.c.l.b16 %v257
    %v322 = vunpack.c.l.b16 %v258
    %v323 = vunpack.c.l.b16 %v259
    %v324 = vunpack.c.l.b16 %v260
    %v325 = vunpack.c.l.b16 %v261
    %v326 = vunpack.c.l.b16 %v262
    %v327 = vunpack.c.l.b16 %v263
    %v328 = vunpack.c.l.b16 %v264
    %v329 = vunpack.c.l.b16 %v265
    %v330 = vunpack.c.l.b16 %v266
    %v331 = vunpack.c.l.b16 %v267
    %v332 = vunpack.c.l.b16 %v268
    %v333 = vunpack.c.l.b16 %v269
    %v334 = vunpack.c.l.b16 %v270
    %v335 = vunpack.c.l.b16 %v271
    %v336 = vunpack.c.l.b16 %v272
    %v337 = vunpack.c.l.b16 %v273
    %v338 = vunpack.c.l.b16 %v274
    %v339 = vunpack.c.l.b16 %v275
    %v340 = vunpack.c.l.b16 %v276
    %v341 = vunpack.c.l.b16 %v277
    %v342 = vunpack.c.l.b16 %v278
    %v343 = vunpack.c.l.b16 %v279
    %v344 = vunpack.c.l.b16 %v280
    %v345 = vunpack.c.l.b16 %v281
    %v346 = vunpack.c.l.b16 %v282
    %v347 = vunpack.c.l.b16 %v283
    %v348 = vpack.c.b16 %v317, %v316
    %v349 = vpack.c.b16 %v319, %v318
    %v350 = vpack.c.b16 %v321, %v320
    %v351 = vpack.c.b16 %v323, %v322
    %v352 = vpack.c.b16 %v325, %v324
    %v353 = vpack.c.b16 %v327, %v326
    %v354 = vpack.c.b16 %v329, %v328
    %v355 = vpack.c.b16 %v331, %v330
    %v356 = vpack.c.b16 %v333, %v332
    %v357 = vpack.c.b16 %v335, %v334
    %v358 = vpack.c.b16 %v337, %v336
    %v359 = vpack.c.b16 %v339, %v338
    %v360 = vpack.c.b16 %v341, %v340
    %v361 = vpack.c.b16 %v343, %v342
    %v362 = vpack.c.b16 %v345, %v344
    %v363 = vpack.c.b16 %v347, %v346
    %380 = vmatpush.bf16.msra.mxu0 %v355
    %381 = vmatpush.bf16.msra.mxu0 %v354
    %382 = vmatpush.bf16.msra.mxu0 %v353
    %383 = vmatpush.bf16.msra.mxu0 %v352
    %384 = vmatpush.bf16.msra.mxu0 %v351
    %385 = vmatpush.bf16.msra.mxu0 %v350
    %386 = vmatpush.bf16.msra.mxu0 %v349
    %387 = vmatpush.bf16.msra.mxu0 %v348
    %388 = vmatmul.bf16.gmra.mxu0 %v250
    %v389 = vpop.f32.mrf.mxu0
    %v390 = vadd.f32 0.0, %v389
    %v391 = vpop.f32.mrf.mxu0
    %v392 = vadd.f32 0.0, %v391
    %393 = vdwg.mxu0
    %394 = vmatpush.bf16.msra.mxu0 %v363
    %395 = vmatpush.bf16.msra.mxu0 %v362
    %396 = vmatpush.bf16.msra.mxu0 %v361
    %397 = vmatpush.bf16.msra.mxu0 %v360
    %398 = vmatpush.bf16.msra.mxu0 %v359
    %399 = vmatpush.bf16.msra.mxu0 %v358
    %400 = vmatpush.bf16.msra.mxu0 %v357
    %401 = vmatpush.bf16.msra.mxu0 %v356
    %402 = vmatmul.bf16.gmra.mxu0 %v251
    %v403 = vpop.f32.mrf.mxu0
    %v404 = vadd.f32 %v390, %v403
    %v405 = vpop.f32.mrf.mxu0
    %v406 = vadd.f32 %v392, %v405
    %407 = vdwg.mxu0
    %v408 = vadd.f32 %v248, %v404
    %v409 = vadd.f32 %v249, %v406
    %410 = vst [vmem:[#allocation7] sm:$0xff] %v408
    %411 = vst [vmem:[#allocation7 + $0x8] sm:$0xff] %v409
    // Predicated region
    $region38: #{_forward_impl.1} parent=1 // pred_check
      %p412 = pneg %p57
    $region39: #{_forward_impl.1} parent=1 // pred_check_branch
      %414 = sbr.rel (%p412) target = $region41
    $region40: #{_forward_impl.1} parent=1 // pred_region
      %v415 = vld [vmem:[#allocation7] sm:$0xff]
      %v416 = vld [vmem:[#allocation7 + $0x8] sm:$0xff]
      %v417 = vld [vmem:[%s5] sm:$0x1]
      %v419 = vperm.slane %v417, 0
      %v421 = vadd.f32 %v415, %v419
      %v422 = vadd.f32 %v416, %v419
      %423 = vst [vmem:[#allocation7] sm:$0xff] %v421
      %424 = vst [vmem:[#allocation7 + $0x8] sm:$0xff] %v422
    $region41: #{_forward_impl.1} parent=1 // pred_fallthru
      _
    // Predicated region
    $region42: #{_forward_impl.1} parent=1 // pred_check
      _
    $region43: #{_forward_impl.1} parent=1 // pred_check_branch
      %426 = sbr.rel (0) target = $region45
    $region44: #{_forward_impl.1} parent=1 // pred_region
      %428 = vsyncadd [#allocation4], 0
      %s429 = sshll.u32 [#allocation7], 4
      %s430 = int_to_ptr.vmem [resolvable:$true] %s429
      %s431 = sshll.u32 %s6, 4
      %s432 = int_to_ptr.hbm [resolvable:$true] %s431
      %437 = dma.vmem_to_hbm [thread:$0]  %s430, 256, %s432, [#allocation4], 128, 128, 8
    $region45: #{_forward_impl.1} parent=1 // pred_fallthru
      _
    // Predicated region
    $region46: #{_forward_impl.1} parent=1 // pred_check
      _
    $region47: #{_forward_impl.1} parent=1 // pred_check_branch
      %439 = sbr.rel (0) target = $region49
    $region48: #{_forward_impl.1} parent=1 // pred_region
      %441 = dma.done [#allocation4], 256
    $region49: #{_forward_impl.1} parent=1 // pred_fallthru
      _
    %442 = vsyncpa [#allocation3], 1
    %443 = vsyncpa [#allocation6], 1
    %444 = vsyncpa [#allocation4], 1

</llo_original>
